<compile_context>
chip_gen: v7x
topology: tpu7x:2x2x1
jax: 0.10.0
libtpu: 0.0.40
codegen_flags: <defaults>
</compile_context>

<pallas_src>
import jax
import jax.numpy as jnp
from jax import lax
from jax.experimental import pallas as pl
from jax.experimental.pallas import tpu as pltpu


# ----------------------------------------------------------------------------
# Wrapper-side glue: separable bilinear resize == F.grid_sample on a full
# regular [-1, 1] grid (mode='bilinear', padding_mode='zeros',
# align_corners=False), expressed as two small interpolation matmuls.
# ----------------------------------------------------------------------------
def _interp_matrix(n_out, n_in):
    xs = jnp.linspace(-1.0, 1.0, n_out)
    src = ((xs + 1.0) * n_in - 1.0) / 2.0            # unnormalize (align_corners=False)
    x0 = jnp.floor(src)
    w1 = src - x0                                     # weight of x0 + 1
    idx = jnp.arange(n_in, dtype=jnp.float32)[None, :]
    x0c = x0[:, None]
    hit0 = ((idx == x0c) & (x0c >= 0) & (x0c <= n_in - 1)).astype(jnp.float32)
    hit1 = ((idx == x0c + 1.0) & (x0c + 1.0 >= 0)
            & (x0c + 1.0 <= n_in - 1)).astype(jnp.float32)
    return hit0 * (1.0 - w1)[:, None] + hit1 * w1[:, None]   # (n_out, n_in)


def _grid_sample_bilinear(img, h_out, w_out):
    """img: (C, H_in, W_in) -> (C, h_out, w_out)."""
    img = img.astype(jnp.float32)
    wy = _interp_matrix(h_out, img.shape[1])          # (h_out, H_in)
    wx = _interp_matrix(w_out, img.shape[2])          # (w_out, W_in)
    tmp = jnp.einsum("hy,cyx->chx", wy, img)
    return jnp.einsum("chx,wx->chw", tmp, wx)


# ----------------------------------------------------------------------------
# Pallas kernel.  Grid = (hw splits [parallel], hw tiles [arbitrary, last]).
# One feature tile is streamed once and reused for every mask channel.
# ----------------------------------------------------------------------------
def _masked_gram_kernel(feat_ref, mask_ref, g_ref):
    """Accumulate per-mask-channel masked Grams over one HW tile.

    feat_ref: (C_f, tile_hw)      input dtype; cast to bf16 here (MXU operand)
    mask_ref: (C_m, 1, tile_hw)   f32
    g_ref:    (C_m, C_f, C_f)     f32 resident accumulator (one per HW split)
    """
    @pl.when(pl.program_id(1) == 0)
    def _init():
        g_ref[...] = jnp.zeros(g_ref.shape, g_ref.dtype)

    feat = feat_ref[...].astype(jnp.bfloat16)          # (C_f, tile_hw)
    c_m = mask_ref.shape[0]
    # Static unroll over mask channels (C_m is small for style layers); the
    # feature tile is loaded from VMEM once per channel, DMA'd from HBM once.
    for m in range(c_m):
        a = feat * mask_ref[m].astype(jnp.bfloat16)    # (C_f, tile_hw)
        # Lane-lane contraction (contract the last dim of BOTH operands):
        # no materialized transpose; f32 accumulation on the MXU.
        g_ref[m] += lax.dot_general(
            a, a, dimension_numbers=(((1,), (1,)), ((), ())),
            preferred_element_type=jnp.float32)
    # NOTE: pipeline_mode=pl.Buffered(3) on feat_spec is a further knob once
    # profiling shows exposed DMA latency; default double-buffering kept here.


# ----------------------------------------------------------------------------
# VMEM budget + tile planning (generation-aware, zero-padding instead of a
# divisor search).
# ----------------------------------------------------------------------------
def _vmem_limit_bytes():
    cap = None
    try:
        cap = getattr(pltpu.get_tpu_info(), "vmem_capacity_bytes", None)
    except Exception:
        cap = None
    if not cap:
        cap = 64 * 1024 * 1024          # conservative fallback (v7x physical VMEM)
    return int(cap) * 3 // 4            # leave headroom for compiler scratch


def _round_up(x, m):
    return -(-x // m) * m


def _plan_tiles(c_f, c_m, hw, feat_itemsize, vmem_limit, max_tile_hw=None):
    """Return (tile_hw, num_splits, tiles_per_split, hw_padded)."""
    # Streamed bytes per HW column (double-buffered feature + f32 mask tiles).
    per_col = 2 * (c_f * feat_itemsize + c_m * 4)
    resident = 2 * c_m * c_f * c_f * 4                  # resident f32 Gram block(s)
    budget = max(int(vmem_limit * 0.6) - resident, per_col * 128)
    t_max = max(128, (budget // per_col) // 128 * 128)
    if max_tile_hw is not None:
        t_max = min(t_max, max(128, (max_tile_hw // 128) * 128))
    # Two-way HW split as a leading "parallel" grid axis (dual-TC on v7x;
    # traffic-neutral on single-TC chips).
    num_splits = 2 if _round_up(hw, 128) >= 256 else 1
    n_tiles = max(num_splits, _round_up(-(-hw // t_max), num_splits))
    tile_hw = _round_up(-(-hw // n_tiles), 128)         # <= t_max by construction
    hw_padded = n_tiles * tile_hw
    return tile_hw, num_splits, n_tiles // num_splits, hw_padded


# ----------------------------------------------------------------------------
# pallas_call wrapper.
# ----------------------------------------------------------------------------
def masked_gram(feat_hw, mask_hw, means=None, max_tile_hw=None):
    """Per-mask-channel normalized Gram matrices of a masked feature map.

    feat_hw: (C_f, HW) feature map flattened over space (any float dtype)
    mask_hw: (C_m, HW) soft masks
    means:   optional precomputed per-channel mask means (C_m,)

    Returns (G, means) with
      G[m] = (F*mask_m)(F*mask_m)^T / (C_f*HW) / mean(mask_m)   (mean 0 -> 1)
    """
    c_f, hw = feat_hw.shape
    c_m = mask_hw.shape[0]

    if means is None:
        means = jnp.mean(mask_hw.astype(jnp.float32), axis=1)
        means = jnp.where(means == 0.0, 1.0, means)

    vmem_limit = _vmem_limit_bytes()
    tile_hw, num_splits, tiles_per_split, hw_padded = _plan_tiles(
        c_f, c_m, hw, feat_hw.dtype.itemsize, vmem_limit, max_tile_hw)

    pad = hw_padded - hw
    if pad:
        # Zero columns contribute nothing to the masked Gram; the mean and the
        # 1/(C_f*HW) scaling use the unpadded HW extent.
        feat_hw = jnp.pad(feat_hw, ((0, 0), (0, pad)))
        mask_hw = jnp.pad(mask_hw, ((0, 0), (0, pad)))
    mask_3d = mask_hw.astype(jnp.float32).reshape(c_m, 1, hw_padded)

    tps = tiles_per_split
    feat_spec = pl.BlockSpec((c_f, tile_hw), lambda g, k: (0, g * tps + k))
    mask_spec = pl.BlockSpec((c_m, 1, tile_hw), lambda g, k: (0, 0, g * tps + k))
    g_spec = pl.BlockSpec((c_m, c_f, c_f), lambda g, k: (g, 0, 0))

    grams = pl.pallas_call(
        _masked_gram_kernel,
        out_shape=jax.ShapeDtypeStruct((num_splits * c_m, c_f, c_f), jnp.float32),
        grid=(num_splits, tiles_per_split),
        in_specs=[feat_spec, mask_spec],
        out_specs=g_spec,
        compiler_params=pltpu.CompilerParams(
            dimension_semantics=("parallel", "arbitrary"),
            vmem_limit_bytes=vmem_limit),
    )(feat_hw, mask_3d)

    # Sum the per-split partial Grams and apply the (linear) normalization in
    # plain JAX (tiny: C_m*C_f^2 elements).
    g = grams.reshape(num_splits, c_m, c_f, c_f).sum(axis=0)
    g = g / (means * jnp.float32(c_f * hw))[:, None, None]
    return g, means


class StyleLayerPallas:
    """Pallas port of the PyTorch StyleLayer (forward-pass semantics)."""

    def __init__(self, saved_feature, content_mask, style_mask, max_tile_hw=None):
        # saved_feature: (1, C_f, H, W); masks: (1, C_m, Hm, Wm)
        _, c_f, h, w = saved_feature.shape
        self.content_mask = content_mask
        self.max_tile_hw = max_tile_hw
        self._cmask_cache = {}     # (h, w) -> (resized content mask, channel means)

        # Unmasked gram of the saved feature (unused by forward; kept for
        # parity with the PyTorch module's self.saved_feature). Init-time only.
        f32 = saved_feature[0].reshape(c_f, h * w).astype(jnp.float32)
        self.saved_feature = (f32 @ f32.T / jnp.float32(c_f * h * w))[None]

        feat = saved_feature[0].reshape(c_f, h * w)
        smask = _grid_sample_bilinear(style_mask[0], h, w).reshape(-1, h * w)
        self.targets, _ = masked_gram(feat, smask, max_tile_hw=max_tile_hw)

    def _content_mask_at(self, h, w):
        key = (h, w)
        if key not in self._cmask_cache:
            c_m = self.content_mask.shape[1]
            cm = _grid_sample_bilinear(self.content_mask[0], h, w).reshape(c_m, h * w)
            means = jnp.mean(cm, axis=1)
            means = jnp.where(means == 0.0, 1.0, means)
            self._cmask_cache[key] = (cm, means)
        return self._cmask_cache[key]

    def __call__(self, input_feature):
        _, c_f, h, w = input_feature.shape
        feat = input_feature[0].reshape(c_f, h * w)
        cmask, means = self._content_mask_at(h, w)       # cached resize + means
        self.inputs_G, _ = masked_gram(feat, cmask, means=means,
                                       max_tile_hw=self.max_tile_hw)
        # Target-MSE loss in plain JAX (tiny elementwise reduce; fuses in XLA).
        self.loss = jnp.sum(
            jnp.mean((self.inputs_G - self.targets) ** 2, axis=(1, 2)) * means)
        return input_feature      # forward returns its input unchanged


# ----------------------------------------------------------------------------
# Plain-JAX reference of the same math (mirrors the kernel's bf16 MXU operands
# with f32 accumulation; mask means / normalization stay exact f32).
# ----------------------------------------------------------------------------
def _reference_gram_loss(feat_hw, mask_hw, targets=None):
    c_f, hw = feat_hw.shape
    a = (mask_hw.astype(jnp.bfloat16)[:, None, :]
         * feat_hw.astype(jnp.bfloat16)[None, :, :])
    g = jnp.einsum("mnr,mkr->mnk", a, a, preferred_element_type=jnp.float32)
    g = g / jnp.float32(c_f * hw)
    means = jnp.mean(mask_hw.astype(jnp.float32), axis=1)
    means = jnp.where(means == 0.0, 1.0, means)
    g = g / means[:, None, None]
    if targets is None:
        return g, None
    loss = jnp.sum(jnp.mean((g - targets) ** 2, axis=(1, 2)) * means)
    return g, loss


if __name__ == "__main__":
    key = jax.random.PRNGKey(0)
    k1, k2, k3, k4 = jax.random.split(key, 4)
    # HW = 16*24 = 384 with max_tile_hw=128 exercises every kernel path:
    # zero-padding (384 -> 512), the 2-way "parallel" HW split, and multi-tile
    # accumulation (2 tiles per split) into the resident Gram block.
    C_F, C_M, H, W = 4, 4, 16, 24
    saved_feature = jax.random.normal(k1, (1, C_F, H, W), jnp.float32)
    content_mask = jax.random.uniform(k2, (1, C_M, H, W), jnp.float32)
    style_mask = jax.random.uniform(k3, (1, C_M, H, W), jnp.float32)
    x = jax.random.normal(k4, (1, C_F, H, W), jnp.float32)

    layer = StyleLayerPallas(saved_feature, content_mask, style_mask,
                             max_tile_hw=128)
    out = layer(x)
    jax.block_until_ready((out, layer.loss, layer.inputs_G, layer.targets))

    # Check targets (style-mask pass) against the reference.
    s_feat = saved_feature[0].reshape(C_F, H * W)
    smask = _grid_sample_bilinear(style_mask[0], H, W).reshape(C_M, H * W)
    t_ref, _ = _reference_gram_loss(s_feat, smask, None)
    assert jnp.allclose(layer.targets, t_ref, rtol=2e-2, atol=1e-5)

    # Check forward grams + loss against the reference.
    feat = x[0].reshape(C_F, H * W)
    cmask = _grid_sample_bilinear(content_mask[0], H, W).reshape(C_M, H * W)
    g_ref, loss_ref = _reference_gram_loss(feat, cmask, layer.targets)
    assert jnp.allclose(layer.inputs_G, g_ref, rtol=2e-2, atol=1e-5)
    assert jnp.allclose(layer.loss, loss_ref, rtol=2e-2, atol=1e-6)
    assert jnp.array_equal(out, x)

    print("KERNEL_OK")
</pallas_src>

<mosaic_0001>
module attributes {stable_mosaic.version = 11 : i64} {
  func.func @_masked_gram_kernel(%arg0: i32, %arg1: i32, %arg2: memref<4x128xf32, #tpu.memory_space<vmem>>, %arg3: memref<4x1x128xf32, #tpu.memory_space<vmem>>, %arg4: memref<4x4x4xf32, #tpu.memory_space<vmem>>) attributes {dimension_semantics = [#tpu.dimension_semantics<parallel>, #tpu.dimension_semantics<arbitrary>], iteration_bounds = array<i64: 2, 2>, scalar_prefetch = 0 : i64, scratch_operands = 0 : i64, tpu.core_type = #tpu.core_type<tc>, window_params = [{transform_indices = @transform_0, window_bounds = array<i64: 4, 128>}, {transform_indices = @transform_1, window_bounds = array<i64: 4, 1, 128>}, {transform_indices = @transform_2, window_bounds = array<i64: 4, 4, 4>}]} {
    %c0_i32 = arith.constant 0 : i32
    %0 = arith.cmpi eq, %arg1, %c0_i32 : i32
    %1 = arith.extui %0 : i1 to i32
    %c0_i32_0 = arith.constant 0 : i32
    %2 = arith.cmpi ne, %1, %c0_i32_0 : i32
    scf.if %2 {
      %cst_38 = arith.constant 0.000000e+00 : f32
      %53 = vector.broadcast %cst_38 : f32 to vector<4x4x4xf32>
      %c0_39 = arith.constant 0 : index
      %c0_40 = arith.constant 0 : index
      %c0_41 = arith.constant 0 : index
      %54 = vector.load %arg4[%c0_39, %c0_40, %c0_41] : memref<4x4x4xf32, #tpu.memory_space<vmem>>, vector<4x4x4xf32>
      tpu.vector_store %arg4[%c0_39, %c0_40, %c0_41], %53 {strides = array<i32>} : memref<4x4x4xf32, #tpu.memory_space<vmem>>, vector<4x4x4xf32>,
    } else {
    }
    %c0 = arith.constant 0 : index
    %c0_1 = arith.constant 0 : index
    %3 = vector.load %arg2[%c0, %c0_1] : memref<4x128xf32, #tpu.memory_space<vmem>>, vector<4x128xf32>
    %4 = arith.truncf %3 : vector<4x128xf32> to vector<4x128xbf16>
    %c0_2 = arith.constant 0 : index
    %c0_3 = arith.constant 0 : index
    %c0_4 = arith.constant 0 : index
    %5 = vector.load %arg3[%c0_2, %c0_3, %c0_4] : memref<4x1x128xf32, #tpu.memory_space<vmem>>, vector<1x1x128xf32>
    %6 = vector.shape_cast %5 : vector<1x1x128xf32> to vector<1x128xf32>
    %7 = arith.truncf %6 : vector<1x128xf32> to vector<1x128xbf16>
    %8 = vector.broadcast %7 : vector<1x128xbf16> to vector<4x128xbf16>
    %9 = arith.mulf %4, %8 : vector<4x128xbf16>
    %c0_5 = arith.constant 0 : index
    %c0_6 = arith.constant 0 : index
    %c0_7 = arith.constant 0 : index
    %10 = vector.load %arg4[%c0_5, %c0_6, %c0_7] : memref<4x4x4xf32, #tpu.memory_space<vmem>>, vector<1x4x4xf32>
    %11 = vector.shape_cast %10 : vector<1x4x4xf32> to vector<4x4xf32>
    %cst = arith.constant dense<0.000000e+00> : vector<4x4xf32>
    %12 = tpu.matmul %9, %9, %cst {dimension_numbers = #tpu.dot_dimension_numbers<[1], [1], [0], [0], [0, 0, 1, 0], [], []>} : vector<4x128xbf16>, vector<4x128xbf16>, vector<4x4xf32> -> vector<4x4xf32>
    %13 = arith.addf %11, %12 : vector<4x4xf32>
    %c0_8 = arith.constant 0 : index
    %c0_9 = arith.constant 0 : index
    %c0_10 = arith.constant 0 : index
    %14 = vector.load %arg4[%c0_8, %c0_9, %c0_10] : memref<4x4x4xf32, #tpu.memory_space<vmem>>, vector<1x4x4xf32>
    %15 = vector.shape_cast %14 : vector<1x4x4xf32> to vector<4x4xf32>
    %16 = vector.shape_cast %13 : vector<4x4xf32> to vector<1x4x4xf32>
    tpu.vector_store %arg4[%c0_8, %c0_9, %c0_10], %16 {strides = array<i32>} : memref<4x4x4xf32, #tpu.memory_space<vmem>>, vector<1x4x4xf32>,
    %c1 = arith.constant 1 : index
    %c0_11 = arith.constant 0 : index
    %c0_12 = arith.constant 0 : index
    %17 = vector.load %arg3[%c1, %c0_11, %c0_12] : memref<4x1x128xf32, #tpu.memory_space<vmem>>, vector<1x1x128xf32>
    %18 = vector.shape_cast %17 : vector<1x1x128xf32> to vector<1x128xf32>
    %19 = arith.truncf %18 : vector<1x128xf32> to vector<1x128xbf16>
    %20 = vector.broadcast %19 : vector<1x128xbf16> to vector<4x128xbf16>
    %21 = arith.mulf %4, %20 : vector<4x128xbf16>
    %c1_13 = arith.constant 1 : index
    %c0_14 = arith.constant 0 : index
    %c0_15 = arith.constant 0 : index
    %22 = vector.load %arg4[%c1_13, %c0_14, %c0_15] : memref<4x4x4xf32, #tpu.memory_space<vmem>>, vector<1x4x4xf32>
    %23 = vector.shape_cast %22 : vector<1x4x4xf32> to vector<4x4xf32>
    %cst_16 = arith.constant dense<0.000000e+00> : vector<4x4xf32>
    %24 = tpu.matmul %21, %21, %cst_16 {dimension_numbers = #tpu.dot_dimension_numbers<[1], [1], [0], [0], [0, 0, 1, 0], [], []>} : vector<4x128xbf16>, vector<4x128xbf16>, vector<4x4xf32> -> vector<4x4xf32>
    %25 = arith.addf %23, %24 : vector<4x4xf32>
    %c1_17 = arith.constant 1 : index
    %c0_18 = arith.constant 0 : index
    %c0_19 = arith.constant 0 : index
    %26 = vector.load %arg4[%c1_17, %c0_18, %c0_19] : memref<4x4x4xf32, #tpu.memory_space<vmem>>, vector<1x4x4xf32>
    %27 = vector.shape_cast %26 : vector<1x4x4xf32> to vector<4x4xf32>
    %28 = vector.shape_cast %25 : vector<4x4xf32> to vector<1x4x4xf32>
    tpu.vector_store %arg4[%c1_17, %c0_18, %c0_19], %28 {strides = array<i32>} : memref<4x4x4xf32, #tpu.memory_space<vmem>>, vector<1x4x4xf32>,
    %c2 = arith.constant 2 : index
    %c0_20 = arith.constant 0 : index
    %c0_21 = arith.constant 0 : index
    %29 = vector.load %arg3[%c2, %c0_20, %c0_21] : memref<4x1x128xf32, #tpu.memory_space<vmem>>, vector<1x1x128xf32>
    %30 = vector.shape_cast %29 : vector<1x1x128xf32> to vector<1x128xf32>
    %31 = arith.truncf %30 : vector<1x128xf32> to vector<1x128xbf16>
    %32 = vector.broadcast %31 : vector<1x128xbf16> to vector<4x128xbf16>
    %33 = arith.mulf %4, %32 : vector<4x128xbf16>
    %c2_22 = arith.constant 2 : index
    %c0_23 = arith.constant 0 : index
    %c0_24 = arith.constant 0 : index
    %34 = vector.load %arg4[%c2_22, %c0_23, %c0_24] : memref<4x4x4xf32, #tpu.memory_space<vmem>>, vector<1x4x4xf32>
    %35 = vector.shape_cast %34 : vector<1x4x4xf32> to vector<4x4xf32>
    %cst_25 = arith.constant dense<0.000000e+00> : vector<4x4xf32>
    %36 = tpu.matmul %33, %33, %cst_25 {dimension_numbers = #tpu.dot_dimension_numbers<[1], [1], [0], [0], [0, 0, 1, 0], [], []>} : vector<4x128xbf16>, vector<4x128xbf16>, vector<4x4xf32> -> vector<4x4xf32>
    %37 = arith.addf %35, %36 : vector<4x4xf32>
    %c2_26 = arith.constant 2 : index
    %c0_27 = arith.constant 0 : index
    %c0_28 = arith.constant 0 : index
    %38 = vector.load %arg4[%c2_26, %c0_27, %c0_28] : memref<4x4x4xf32, #tpu.memory_space<vmem>>, vector<1x4x4xf32>
    %39 = vector.shape_cast %38 : vector<1x4x4xf32> to vector<4x4xf32>
    %40 = vector.shape_cast %37 : vector<4x4xf32> to vector<1x4x4xf32>
    tpu.vector_store %arg4[%c2_26, %c0_27, %c0_28], %40 {strides = array<i32>} : memref<4x4x4xf32, #tpu.memory_space<vmem>>, vector<1x4x4xf32>,
    %c3 = arith.constant 3 : index
    %c0_29 = arith.constant 0 : index
    %c0_30 = arith.constant 0 : index
    %41 = vector.load %arg3[%c3, %c0_29, %c0_30] : memref<4x1x128xf32, #tpu.memory_space<vmem>>, vector<1x1x128xf32>
    %42 = vector.shape_cast %41 : vector<1x1x128xf32> to vector<1x128xf32>
    %43 = arith.truncf %42 : vector<1x128xf32> to vector<1x128xbf16>
    %44 = vector.broadcast %43 : vector<1x128xbf16> to vector<4x128xbf16>
    %45 = arith.mulf %4, %44 : vector<4x128xbf16>
    %c3_31 = arith.constant 3 : index
    %c0_32 = arith.constant 0 : index
    %c0_33 = arith.constant 0 : index
    %46 = vector.load %arg4[%c3_31, %c0_32, %c0_33] : memref<4x4x4xf32, #tpu.memory_space<vmem>>, vector<1x4x4xf32>
    %47 = vector.shape_cast %46 : vector<1x4x4xf32> to vector<4x4xf32>
    %cst_34 = arith.constant dense<0.000000e+00> : vector<4x4xf32>
    %48 = tpu.matmul %45, %45, %cst_34 {dimension_numbers = #tpu.dot_dimension_numbers<[1], [1], [0], [0], [0, 0, 1, 0], [], []>} : vector<4x128xbf16>, vector<4x128xbf16>, vector<4x4xf32> -> vector<4x4xf32>
    %49 = arith.addf %47, %48 : vector<4x4xf32>
    %c3_35 = arith.constant 3 : index
    %c0_36 = arith.constant 0 : index
    %c0_37 = arith.constant 0 : index
    %50 = vector.load %arg4[%c3_35, %c0_36, %c0_37] : memref<4x4x4xf32, #tpu.memory_space<vmem>>, vector<1x4x4xf32>
    %51 = vector.shape_cast %50 : vector<1x4x4xf32> to vector<4x4xf32>
    %52 = vector.shape_cast %49 : vector<4x4xf32> to vector<1x4x4xf32>
    tpu.vector_store %arg4[%c3_35, %c0_36, %c0_37], %52 {strides = array<i32>} : memref<4x4x4xf32, #tpu.memory_space<vmem>>, vector<1x4x4xf32>,
    return
  }
  func.func @transform_0(%arg0: i32, %arg1: i32) -> (i32, i32) {
    %c2_i32 = arith.constant 2 : i32
    %0 = arith.muli %arg0, %c2_i32 : i32
    %1 = arith.addi %0, %arg1 : i32
    %c0_i32 = arith.constant 0 : i32
    %c0_i32_0 = arith.constant 0 : i32
    return %c0_i32, %1 : i32, i32
  }
  func.func @transform_1(%arg0: i32, %arg1: i32) -> (i32, i32, i32) {
    %c2_i32 = arith.constant 2 : i32
    %0 = arith.muli %arg0, %c2_i32 : i32
    %1 = arith.addi %0, %arg1 : i32
    %c0_i32 = arith.constant 0 : i32
    %c0_i32_0 = arith.constant 0 : i32
    %c0_i32_1 = arith.constant 0 : i32
    return %c0_i32, %c0_i32_0, %1 : i32, i32, i32
  }
  func.func @transform_2(%arg0: i32, %arg1: i32) -> (i32, i32, i32) {
    %c0_i32 = arith.constant 0 : i32
    %c0_i32_0 = arith.constant 0 : i32
    %c0_i32_1 = arith.constant 0 : i32
    return %arg0, %c0_i32, %c0_i32_0 : i32, i32, i32
  }
}

</mosaic_0001>

<llo_original>
// kernel: tpu_custom_call.1
$region0: #{tpu_custom_call.1}
  #allocation0 [shape = 'u32[]', space=smem, size = 0x4, offset = 0x4, fixed_abs, tag = 'smem constant byte address 0x4 - core index']
  #allocation1 [shape = 'u32[144,128]{1,0:T(1,128)}', space=vmem, size = 0x12000, scoped, tag = 'internal scratch']
  %s0 = inlined_call_operand.hbm [shape: f32[4,512], index: 0, kind: input, shape index: {}]
  %s1 = inlined_call_operand.hbm [shape: f32[4,1,512], index: 1, kind: input, shape index: {}]
  %s2 = inlined_call_operand.vmem [shape: f32[8,4,4], index: 2, kind: output, shape index: {}]
  %s3 = sld [smem:[#allocation0]]
  $region53: #{tpu_custom_call.1} parent=0
    _
  %s5 = ssub.s32 1, %s3
  %s6 = scalar_select 0, %s5, %s3
  $region1: #{tpu_custom_call.1} parent=0
    #allocation2 [shape = 'u8[4096]{0}', space=vmem, size = 0x1000, scoped, tag = 'input window, operand 0']
    #allocation3 [shape = 's32[2]{0}', space=sflag, size = 0x8, scoped, tag = 'scoped memory for tpu_custom_call.1']
    #allocation4 [shape = 'u8[4096]{0}', space=vmem, size = 0x1000, scoped, tag = 'input window, operand 1']
    #allocation5 [shape = 's32[2]{0}', space=sflag, size = 0x8, scoped, tag = 'scoped memory for tpu_custom_call.1']
    %7 = vsyncpa [#allocation3], 0
    %s8 = scalar_lea.sflag [#allocation3], 1
    %9 = vsyncpa %s8, 0
    %10 = vsyncpa [#allocation5], 0
    %s11 = scalar_lea.sflag [#allocation5], 1
    %12 = vsyncpa %s11, 0
    loop: start=0, step=1, limit=6
    $region2: #{tpu_custom_call.1} parent=1 // loop_pre_header
      _
    $region3: #{tpu_custom_call.1} parent=1 // loop_header
      %s14 = sphi 0, %s18
      %p15 = scmp.ge.s32.totalorder %s14, 6
      %s21 = sphi 0, %s33
      %s22 = sphi 0, %s29
      %s23 = sphi 0, %s21
      %s24 = sphi 0, %s22
      %s25 = sphi 0, %s23
      %s26 = sphi 0, %s24
      %s40 = sphi 0, %s42
      %s43 = sphi 0, %s40
      %s44 = sphi 0, %s43
      %s60 = sphi 0, %s44
      %s70 = sphi 0, %s72
      %s73 = sphi 0, %s70
      %s74 = sphi 0, %s73
      %s90 = sphi 0, %s74
      %s96 = sphi 0, %s98
      %s99 = sphi 0, %s96
      %s100 = sphi 0, %s99
      %s116 = sphi 0, %s100
    $region4: #{tpu_custom_call.1} parent=1 // loop_header_branch
      %17 = sbr.rel (%p15) target = $region8
    $region5: #{tpu_custom_call.1} parent=1 // loop_body
      %s19 = ssub.s32 %s14, 1
      %s20 = ssub.s32 %s14, 2
      %s27 = sadd.s32 1, %s22
      %p28 = scmp.ge.s32.totalorder %s27, 2
      %s29 = scalar_select %p28, 0, %s27
      %s30 = sadd.s32 1, %s21
      %s31 = scalar_select %p28, %s30, %s21
      %p32 = scmp.ge.s32.totalorder %s31, 2
      %s33 = scalar_select %p32, 0, %s31
      %s34 = smul.u32 %s21, 2
      %s35 = sadd.s32 %s34, %s22
      %s36 = smul.u32 %s33, 2
      %s37 = sadd.s32 %s36, %s29
      %s38 = ssub.s32 %s35, %s37
      %p39 = scmp.eq.s32.totalorder %s38, 0
      %s41 = sadd.s32 %s40, 1
      %s42 = scalar_select %p39, %s40, %s41
      %p45 = pneg %p39
      %p46 = scmp.eq.s32.totalorder %s14, 3
      %p47 = por %p45, %p46
      %p48 = scmp.ne.s32.totalorder %s40, %s43
      %p49 = scmp.eq.s32.totalorder %s14, 0
      %p50 = por %p48, %p49
      %p51 = scmp.ne.s32.totalorder %s40, %s43
      %p52 = scmp.eq.s32.totalorder %s19, 3
      %p53 = por %p51, %p52
      %p54 = scmp.ne.s32.totalorder %s43, %s44
      %p55 = scmp.eq.s32.totalorder %s19, 0
      %p56 = por %p54, %p55
      %p57 = scmp.ne.s32.totalorder %s43, %s44
      %p58 = scmp.eq.s32.totalorder %s20, 3
      %p59 = por %p57, %p58
      %p61 = scmp.ne.s32.totalorder %s44, %s60
      %p62 = scmp.eq.s32.totalorder %s20, 0
      %p63 = por %p61, %p62
      %s64 = smul.u32 %s21, 2
      %s65 = sadd.s32 %s64, %s22
      %s66 = smul.u32 %s33, 2
      %s67 = sadd.s32 %s66, %s29
      %s68 = ssub.s32 %s65, %s67
      %p69 = scmp.eq.s32.totalorder %s68, 0
      %s71 = sadd.s32 %s70, 1
      %s72 = scalar_select %p69, %s70, %s71
      %p75 = pneg %p69
      %p76 = scmp.eq.s32.totalorder %s14, 3
      %p77 = por %p75, %p76
      %p78 = scmp.ne.s32.totalorder %s70, %s73
      %p79 = scmp.eq.s32.totalorder %s14, 0
      %p80 = por %p78, %p79
      %p81 = scmp.ne.s32.totalorder %s70, %s73
      %p82 = scmp.eq.s32.totalorder %s19, 3
      %p83 = por %p81, %p82
      %p84 = scmp.ne.s32.totalorder %s73, %s74
      %p85 = scmp.eq.s32.totalorder %s19, 0
      %p86 = por %p84, %p85
      %p87 = scmp.ne.s32.totalorder %s73, %s74
      %p88 = scmp.eq.s32.totalorder %s20, 3
      %p89 = por %p87, %p88
      %p91 = scmp.ne.s32.totalorder %s74, %s90
      %p92 = scmp.eq.s32.totalorder %s20, 0
      %p93 = por %p91, %p92
      %s94 = ssub.s32 %s21, %s33
      %p95 = scmp.eq.s32.totalorder %s94, 0
      %s97 = sadd.s32 %s96, 1
      %s98 = scalar_select %p95, %s96, %s97
      %p101 = pneg %p95
      %p102 = scmp.eq.s32.totalorder %s14, 3
      %p103 = por %p101, %p102
      %p104 = scmp.ne.s32.totalorder %s96, %s99
      %p105 = scmp.eq.s32.totalorder %s14, 0
      %p106 = por %p104, %p105
      %p107 = scmp.ne.s32.totalorder %s96, %s99
      %p108 = scmp.eq.s32.totalorder %s19, 3
      %p109 = por %p107, %p108
      %p110 = scmp.ne.s32.totalorder %s99, %s100
      %p111 = scmp.eq.s32.totalorder %s19, 0
      %p112 = por %p110, %p111
      %p113 = scmp.ne.s32.totalorder %s99, %s100
      %p114 = scmp.eq.s32.totalorder %s20, 3
      %p115 = por %p113, %p114
      %p117 = scmp.ne.s32.totalorder %s100, %s116
      %p118 = scmp.eq.s32.totalorder %s20, 0
      %p119 = por %p117, %p118
      %p120 = scmp.le.s32.totalorder 1, %s14
      %p121 = scmp.lt.s32.totalorder %s14, 5
      %p122 = pnand %p120, %p121
      %p123 = pneg %p122
      // Predicated region
      $region9: #{tpu_custom_call.1} parent=5 // pred_check
        _
      $region10: #{tpu_custom_call.1} parent=5 // pred_check_branch
        %125 = sbr.rel (%p122) target = $region12
      $region11: #{tpu_custom_call.1} parent=5 // pred_region
        %s126 = ssub.s32 %s14, 1
      $region12: #{tpu_custom_call.1} parent=5 // pred_fallthru
        _
      %p127 = scmp.lt.s32.totalorder %s14, 4
      // Predicated region
      $region13: #{tpu_custom_call.1} parent=5 // pred_check
        %p128 = pneg %p127
      $region14: #{tpu_custom_call.1} parent=5 // pred_check_branch
        %130 = sbr.rel (%p128) target = $region16
      $region15: #{tpu_custom_call.1} parent=5 // pred_region
        // Predicated region
        $region17: #{tpu_custom_call.1} parent=15 // pred_check
          %p131 = pneg %p50
        $region18: #{tpu_custom_call.1} parent=15 // pred_check_branch
          %133 = sbr.rel (%p131) target = $region20
        $region19: #{tpu_custom_call.1} parent=15 // pred_region
          %s134 = sand.u32 %s40, 1
          %s135 = scalar_lea.sflag [#allocation3], %s134
          %s136 = sand.u32 %s40, 1
          %s137 = smul.addr %s136, 4
          %s138 = scalar_lea.vmem [#allocation2], %s137
          %s139 = smul.u32 %s21, 2
          %s140 = sadd.s32 %s139, %s22
          %s142 = ssub.s32 64, 64
          %143 = vsyncadd %s135, %s142
          %s144 = smul.addr %s140, 64
          %s145 = scalar_lea.hbm %s0, %s144
          %s147 = sshll.u32 %s138, 4
          %s148 = int_to_ptr.vmem [resolvable:$true] %s147
          %150 = dma.hbm_to_vmem [thread:$0]  %s145, 64, %s148, %s135
        $region20: #{tpu_custom_call.1} parent=15 // pred_fallthru
          _
        // Predicated region
        $region21: #{tpu_custom_call.1} parent=15 // pred_check
          %p151 = pneg %p80
        $region22: #{tpu_custom_call.1} parent=15 // pred_check_branch
          %153 = sbr.rel (%p151) target = $region24
        $region23: #{tpu_custom_call.1} parent=15 // pred_region
          %s154 = sand.u32 %s70, 1
          %s155 = scalar_lea.sflag [#allocation5], %s154
          %s156 = sand.u32 %s70, 1
          %s157 = smul.addr %s156, 4
          %s158 = scalar_lea.vmem [#allocation4], %s157
          %s159 = smul.u32 %s21, 2
          %s160 = sadd.s32 %s159, %s22
          %s162 = ssub.s32 64, 64
          %163 = vsyncadd %s155, %s162
          %s164 = smul.addr %s160, 16
          %s165 = scalar_lea.hbm %s1, %s164
          %s166 = sshll.u32 %s158, 4
          %s167 = int_to_ptr.vmem [resolvable:$true] %s166
          %172 = dma.hbm_to_vmem [thread:$0]  %s165, 64, %s167, %s155, 64, 16, 1
        $region24: #{tpu_custom_call.1} parent=15 // pred_fallthru
          _
      $region16: #{tpu_custom_call.1} parent=5 // pred_fallthru
        _
      %p173 = scmp.le.s32.totalorder 1, %s14
      %p174 = scmp.lt.s32.totalorder %s14, 5
      %p175 = pnand %p173, %p174
      %p176 = pneg %p175
      // Predicated region
      $region25: #{tpu_custom_call.1} parent=5 // pred_check
        _
      $region26: #{tpu_custom_call.1} parent=5 // pred_check_branch
        %178 = sbr.rel (%p175) target = $region28
      $region27: #{tpu_custom_call.1} parent=5 // pred_region
        %s179 = ssub.s32 %s14, 1
        %s180 = sand.u32 %s43, 1
        %s181 = scalar_lea.sflag [#allocation3], %s180
        %s182 = sand.u32 %s43, 1
        %s183 = smul.addr %s182, 4
        %s184 = scalar_lea.vmem [#allocation2], %s183
        // Predicated region
        $region29: #{tpu_custom_call.1} parent=27 // pred_check
          %p185 = pneg %p56
        $region30: #{tpu_custom_call.1} parent=27 // pred_check_branch
          %187 = sbr.rel (%p185) target = $region32
        $region31: #{tpu_custom_call.1} parent=27 // pred_region
          %188 = dma.done %s181, 64
        $region32: #{tpu_custom_call.1} parent=27 // pred_fallthru
          _
        %s189 = sand.u32 %s73, 1
        %s190 = scalar_lea.sflag [#allocation5], %s189
        %s191 = sand.u32 %s73, 1
        %s192 = smul.addr %s191, 4
        %s193 = scalar_lea.vmem [#allocation4], %s192
        // Predicated region
        $region33: #{tpu_custom_call.1} parent=27 // pred_check
          %p194 = pneg %p86
        $region34: #{tpu_custom_call.1} parent=27 // pred_check_branch
          %196 = sbr.rel (%p194) target = $region36
        $region35: #{tpu_custom_call.1} parent=27 // pred_region
          %197 = dma.done %s190, 64
        $region36: #{tpu_custom_call.1} parent=27 // pred_fallthru
          _
        %s198 = sand.u32 %s43, 1
        %s199 = scalar_lea.sflag [#allocation3], %s198
        %s200 = sand.u32 %s43, 1
        %s201 = smul.addr %s200, 4
        %s202 = scalar_lea.vmem [#allocation2], %s201
        %p203 = pneg %p56
        %p204 = pneg %p53
        %s205 = sand.u32 %s73, 1
        %s206 = scalar_lea.sflag [#allocation5], %s205
        %s207 = sand.u32 %s73, 1
        %s208 = smul.addr %s207, 4
        %s209 = scalar_lea.vmem [#allocation4], %s208
        %p210 = pneg %p86
        %p211 = pneg %p83
        %p212 = pneg %p112
        %p213 = pneg %p109
        %s214 = smul.u32 4, %s23
        %p215 = scmp.lt.s32.totalorder %s214, 7
        %s216 = scalar_select %p215, %s214, 7
        %s217 = smul.addr %s216, 4
        %s218 = scalar_lea.vmem %s2, %s217
        %s219 = smul.u32 %s23, 2
        %s220 = sadd.s32 %s219, %s24
        %s221 = smul.u32 %s23, 2
        %s222 = sadd.s32 %s221, %s24
        %s223 = smul.u32 4, %s23
        %p224 = scmp.lt.s32.totalorder %s223, 7
        %s225 = scalar_select %p224, %s223, 7
        %s226 = smul.addr %s225, 4
        %s227 = scalar_lea.vmem %s2, %s226
        %s228 = smul.u32 4, %s23
        %p230 = scmp.eq.s32.totalorder %s24, 0
        // Predicated region
        $region37: #{tpu_custom_call.1} parent=27 // pred_check
          %p231 = pneg %p230
        $region38: #{tpu_custom_call.1} parent=27 // pred_check_branch
          %233 = sbr.rel (%p231) target = $region40
        $region39: #{tpu_custom_call.1} parent=27 // pred_region
          %vm234 = vcmask 27648
          %235 = vst.msk [vmem:[%s227] sm:$0xf] %vm234, 0.0
          %236 = vst.msk [vmem:[%s227 + $0x4] sm:$0xf] %vm234, 0.0
          %237 = vst.msk [vmem:[%s227 + $0x8] sm:$0xf] %vm234, 0.0
          %238 = vst.msk [vmem:[%s227 + $0xc] sm:$0xf] %vm234, 0.0
        $region40: #{tpu_custom_call.1} parent=27 // pred_fallthru
          _
        %v239 = vld [vmem:[%s184] sm:$0xf]
        %v240 = vpack.c.bf16 %v239, %v239
        %v241 = vld [vmem:[%s193] sm:$0x1]
        %v242 = vpack.c.bf16 %v241, %v241
        %v244 = vpack.i.b16 %v242, %v242
        %v246 = vlaneseq
        %v247 = vshrl.u32 %v246, 7
        %v248 = vsub.s32 0, %v247
        %v249 = vrot.slane %v244, %v248
        %v250 = vmul.bf16 %v240, %v249
        %v251 = vld [vmem:[%s227] sm:$0xf]
        %252 = vmatprep.subr.bf16.mxu0 0
        %253 = vmatpush1.bf16.xpose.msra.mxu0 %v250
        %254 = vmatprep.subr.bf16.mxu0 0
        %255 = vmatpush1.bf16.xpose.msra.mxu0 0
        %256 = vmatprep.subr.bf16.mxu0 0
        %257 = vmatpush1.bf16.xpose.msra.mxu0 0
        %258 = vmatprep.subr.bf16.mxu0 0
        %259 = vmatpush1.bf16.xpose.msra.mxu0 0
        %260 = vmatprep.subr.bf16.mxu0 0
        %261 = vmatpush1.bf16.xpose.msra.mxu0 0
        %262 = vmatprep.subr.bf16.mxu0 0
        %263 = vmatpush1.bf16.xpose.msra.mxu0 0
        %264 = vmatprep.subr.bf16.mxu0 0
        %265 = vmatpush1.bf16.xpose.msra.mxu0 0
        %266 = vmatprep.subr.bf16.mxu0 0
        %267 = vmatpush1.bf16.xpose.msra.mxu0 0
        %268 = vmatprep.subr.bf16.mxu0 0
        %269 = vmatpush1.bf16.xpose.msra.mxu0 0
        %270 = vmatprep.subr.bf16.mxu0 0
        %271 = vmatpush1.bf16.xpose.msra.mxu0 0
        %272 = vmatprep.subr.bf16.mxu0 0
        %273 = vmatpush1.bf16.xpose.msra.mxu0 0
        %274 = vmatprep.subr.bf16.mxu0 0
        %275 = vmatpush1.bf16.xpose.msra.mxu0 0
        %276 = vmatprep.subr.bf16.mxu0 0
        %277 = vmatpush1.bf16.xpose.msra.mxu0 0
        %278 = vmatprep.subr.bf16.mxu0 0
        %279 = vmatpush1.bf16.xpose.msra.mxu0 0
        %280 = vmatprep.subr.bf16.mxu0 0
        %281 = vmatpush1.bf16.xpose.msra.mxu0 0
        %282 = vmatprep.subr.bf16.mxu0 0
        %283 = vmatpush1.bf16.xpose.msra.mxu0 0
        %284 = vmatprep.mubr.bf16.mxu0 0
        %285 = vmatmul.mubr.bf16.gmra.mrb[0].mxu0 %v250
        %v286 = vpop.f32.mrb[0].mxu0
        %v287 = vadd.f32 0.0, %v286
        %v288 = vpop.f32.mrb[0].mxu0
        %v289 = vpop.f32.mrb[0].mxu0
        %v290 = vpop.f32.mrb[0].mxu0
        %291 = vdwg.mxu0
        %v292 = vadd.f32 %v251, %v287
        %vm293 = vcmask 27648
        %294 = vst.msk [vmem:[%s227] sm:$0xf] %vm293, %v292
        %s295 = scalar_lea.vmem %s193, 1 [#allocation4]
        %v296 = vld [vmem:[%s295] sm:$0x1]
        %v297 = vpack.c.bf16 %v296, %v296
        %v299 = vpack.i.b16 %v297, %v297
        %v301 = vlaneseq
        %v302 = vshrl.u32 %v301, 7
        %v303 = vsub.s32 0, %v302
        %v304 = vrot.slane %v299, %v303
        %v305 = vmul.bf16 %v240, %v304
        %s306 = scalar_lea.vmem %s227, 4
        %v307 = vld [vmem:[%s306] sm:$0xf]
        %308 = vmatprep.subr.bf16.mxu0 0
        %309 = vmatpush1.bf16.xpose.msra.mxu0 %v305
        %310 = vmatprep.subr.bf16.mxu0 0
        %311 = vmatpush1.bf16.xpose.msra.mxu0 0
        %312 = vmatprep.subr.bf16.mxu0 0
        %313 = vmatpush1.bf16.xpose.msra.mxu0 0
        %314 = vmatprep.subr.bf16.mxu0 0
        %315 = vmatpush1.bf16.xpose.msra.mxu0 0
        %316 = vmatprep.subr.bf16.mxu0 0
        %317 = vmatpush1.bf16.xpose.msra.mxu0 0
        %318 = vmatprep.subr.bf16.mxu0 0
        %319 = vmatpush1.bf16.xpose.msra.mxu0 0
        %320 = vmatprep.subr.bf16.mxu0 0
        %321 = vmatpush1.bf16.xpose.msra.mxu0 0
        %322 = vmatprep.subr.bf16.mxu0 0
        %323 = vmatpush1.bf16.xpose.msra.mxu0 0
        %324 = vmatprep.subr.bf16.mxu0 0
        %325 = vmatpush1.bf16.xpose.msra.mxu0 0
        %326 = vmatprep.subr.bf16.mxu0 0
        %327 = vmatpush1.bf16.xpose.msra.mxu0 0
        %328 = vmatprep.subr.bf16.mxu0 0
        %329 = vmatpush1.bf16.xpose.msra.mxu0 0
        %330 = vmatprep.subr.bf16.mxu0 0
        %331 = vmatpush1.bf16.xpose.msra.mxu0 0
        %332 = vmatprep.subr.bf16.mxu0 0
        %333 = vmatpush1.bf16.xpose.msra.mxu0 0
        %334 = vmatprep.subr.bf16.mxu0 0
        %335 = vmatpush1.bf16.xpose.msra.mxu0 0
        %336 = vmatprep.subr.bf16.mxu0 0
        %337 = vmatpush1.bf16.xpose.msra.mxu0 0
        %338 = vmatprep.subr.bf16.mxu0 0
        %339 = vmatpush1.bf16.xpose.msra.mxu0 0
        %340 = vmatprep.mubr.bf16.mxu0 0
        %341 = vmatmul.mubr.bf16.gmra.mrb[0].mxu0 %v305
        %v342 = vpop.f32.mrb[0].mxu0
        %v343 = vadd.f32 0.0, %v342
        %v344 = vpop.f32.mrb[0].mxu0
        %v345 = vpop.f32.mrb[0].mxu0
        %v346 = vpop.f32.mrb[0].mxu0
        %347 = vdwg.mxu0
        %v348 = vadd.f32 %v307, %v343
        %349 = vst.msk [vmem:[%s306] sm:$0xf] %vm293, %v348
        %s350 = scalar_lea.vmem %s193, 2 [#allocation4]
        %v351 = vld [vmem:[%s350] sm:$0x1]
        %v352 = vpack.c.bf16 %v351, %v351
        %v354 = vpack.i.b16 %v352, %v352
        %v356 = vlaneseq
        %v357 = vshrl.u32 %v356, 7
        %v358 = vsub.s32 0, %v357
        %v359 = vrot.slane %v354, %v358
        %v360 = vmul.bf16 %v240, %v359
        %s361 = scalar_lea.vmem %s227, 8
        %v362 = vld [vmem:[%s361] sm:$0xf]
        %363 = vmatprep.subr.bf16.mxu0 0
        %364 = vmatpush1.bf16.xpose.msra.mxu0 %v360
        %365 = vmatprep.subr.bf16.mxu0 0
        %366 = vmatpush1.bf16.xpose.msra.mxu0 0
        %367 = vmatprep.subr.bf16.mxu0 0
        %368 = vmatpush1.bf16.xpose.msra.mxu0 0
        %369 = vmatprep.subr.bf16.mxu0 0
        %370 = vmatpush1.bf16.xpose.msra.mxu0 0
        %371 = vmatprep.subr.bf16.mxu0 0
        %372 = vmatpush1.bf16.xpose.msra.mxu0 0
        %373 = vmatprep.subr.bf16.mxu0 0
        %374 = vmatpush1.bf16.xpose.msra.mxu0 0
        %375 = vmatprep.subr.bf16.mxu0 0
        %376 = vmatpush1.bf16.xpose.msra.mxu0 0
        %377 = vmatprep.subr.bf16.mxu0 0
        %378 = vmatpush1.bf16.xpose.msra.mxu0 0
        %379 = vmatprep.subr.bf16.mxu0 0
        %380 = vmatpush1.bf16.xpose.msra.mxu0 0
        %381 = vmatprep.subr.bf16.mxu0 0
        %382 = vmatpush1.bf16.xpose.msra.mxu0 0
        %383 = vmatprep.subr.bf16.mxu0 0
        %384 = vmatpush1.bf16.xpose.msra.mxu0 0
        %385 = vmatprep.subr.bf16.mxu0 0
        %386 = vmatpush1.bf16.xpose.msra.mxu0 0
        %387 = vmatprep.subr.bf16.mxu0 0
        %388 = vmatpush1.bf16.xpose.msra.mxu0 0
        %389 = vmatprep.subr.bf16.mxu0 0
        %390 = vmatpush1.bf16.xpose.msra.mxu0 0
        %391 = vmatprep.subr.bf16.mxu0 0
        %392 = vmatpush1.bf16.xpose.msra.mxu0 0
        %393 = vmatprep.subr.bf16.mxu0 0
        %394 = vmatpush1.bf16.xpose.msra.mxu0 0
        %395 = vmatprep.mubr.bf16.mxu0 0
        %396 = vmatmul.mubr.bf16.gmra.mrb[0].mxu0 %v360
        %v397 = vpop.f32.mrb[0].mxu0
        %v398 = vadd.f32 0.0, %v397
        %v399 = vpop.f32.mrb[0].mxu0
        %v400 = vpop.f32.mrb[0].mxu0
        %v401 = vpop.f32.mrb[0].mxu0
        %402 = vdwg.mxu0
        %v403 = vadd.f32 %v362, %v398
        %404 = vst.msk [vmem:[%s361] sm:$0xf] %vm293, %v403
        %s405 = scalar_lea.vmem %s193, 3 [#allocation4]
        %v406 = vld [vmem:[%s405] sm:$0x1]
        %v407 = vpack.c.bf16 %v406, %v406
        %v409 = vpack.i.b16 %v407, %v407
        %v411 = vlaneseq
        %v412 = vshrl.u32 %v411, 7
        %v413 = vsub.s32 0, %v412
        %v414 = vrot.slane %v409, %v413
        %v415 = vmul.bf16 %v240, %v414
        %s416 = scalar_lea.vmem %s227, 12
        %v417 = vld [vmem:[%s416] sm:$0xf]
        %418 = vmatprep.subr.bf16.mxu0 0
        %419 = vmatpush1.bf16.xpose.msra.mxu0 %v415
        %420 = vmatprep.subr.bf16.mxu0 0
        %421 = vmatpush1.bf16.xpose.msra.mxu0 0
        %422 = vmatprep.subr.bf16.mxu0 0
        %423 = vmatpush1.bf16.xpose.msra.mxu0 0
        %424 = vmatprep.subr.bf16.mxu0 0
        %425 = vmatpush1.bf16.xpose.msra.mxu0 0
        %426 = vmatprep.subr.bf16.mxu0 0
        %427 = vmatpush1.bf16.xpose.msra.mxu0 0
        %428 = vmatprep.subr.bf16.mxu0 0
        %429 = vmatpush1.bf16.xpose.msra.mxu0 0
        %430 = vmatprep.subr.bf16.mxu0 0
        %431 = vmatpush1.bf16.xpose.msra.mxu0 0
        %432 = vmatprep.subr.bf16.mxu0 0
        %433 = vmatpush1.bf16.xpose.msra.mxu0 0
        %434 = vmatprep.subr.bf16.mxu0 0
        %435 = vmatpush1.bf16.xpose.msra.mxu0 0
        %436 = vmatprep.subr.bf16.mxu0 0
        %437 = vmatpush1.bf16.xpose.msra.mxu0 0
        %438 = vmatprep.subr.bf16.mxu0 0
        %439 = vmatpush1.bf16.xpose.msra.mxu0 0
        %440 = vmatprep.subr.bf16.mxu0 0
        %441 = vmatpush1.bf16.xpose.msra.mxu0 0
        %442 = vmatprep.subr.bf16.mxu0 0
        %443 = vmatpush1.bf16.xpose.msra.mxu0 0
        %444 = vmatprep.subr.bf16.mxu0 0
        %445 = vmatpush1.bf16.xpose.msra.mxu0 0
        %446 = vmatprep.subr.bf16.mxu0 0
        %447 = vmatpush1.bf16.xpose.msra.mxu0 0
        %448 = vmatprep.subr.bf16.mxu0 0
        %449 = vmatpush1.bf16.xpose.msra.mxu0 0
        %450 = vmatprep.mubr.bf16.mxu0 0
        %451 = vmatmul.mubr.bf16.gmra.mrb[0].mxu0 %v415
        %v452 = vpop.f32.mrb[0].mxu0
        %v453 = vadd.f32 0.0, %v452
        %v454 = vpop.f32.mrb[0].mxu0
        %v455 = vpop.f32.mrb[0].mxu0
        %v456 = vpop.f32.mrb[0].mxu0
        %457 = vdwg.mxu0
        %v458 = vadd.f32 %v417, %v453
        %459 = vst.msk [vmem:[%s416] sm:$0xf] %vm293, %v458
        %s460 = smul.u32 4, %s23
        %p461 = scmp.lt.s32.totalorder %s460, 7
        %s462 = scalar_select %p461, %s460, 7
        %s463 = smul.addr %s462, 4
        %s464 = scalar_lea.vmem %s2, %s463
        // Predicated region
        $region41: #{tpu_custom_call.1} parent=27 // pred_check
          %p465 = pneg %p109
        $region42: #{tpu_custom_call.1} parent=27 // pred_check_branch
          %467 = sbr.rel (%p465) target = $region44
        $region43: #{tpu_custom_call.1} parent=27 // pred_region
          %s468 = smul.u32 4, %s23
        $region44: #{tpu_custom_call.1} parent=27 // pred_fallthru
          _
      $region28: #{tpu_custom_call.1} parent=5 // pred_fallthru
        _
      %p469 = scmp.le.s32.totalorder 2, %s14
      // Predicated region
      $region45: #{tpu_custom_call.1} parent=5 // pred_check
        %p470 = pneg %p469
      $region46: #{tpu_custom_call.1} parent=5 // pred_check_branch
        %472 = sbr.rel (%p470) target = $region48
      $region47: #{tpu_custom_call.1} parent=5 // pred_region
        %s473 = ssub.s32 %s14, 2
        // Predicated region
        $region49: #{tpu_custom_call.1} parent=47 // pred_check
          %p474 = pneg %p115
        $region50: #{tpu_custom_call.1} parent=47 // pred_check_branch
          %476 = sbr.rel (%p474) target = $region52
        $region51: #{tpu_custom_call.1} parent=47 // pred_region
          %s477 = smul.u32 4, %s25
          %p478 = scmp.lt.s32.totalorder %s477, 7
          %s479 = scalar_select %p478, %s477, 7
          %s480 = smul.addr %s479, 4
          %s481 = scalar_lea.vmem %s2, %s480
        $region52: #{tpu_custom_call.1} parent=47 // pred_fallthru
          _
      $region48: #{tpu_custom_call.1} parent=5 // pred_fallthru
        _
    $region6: #{tpu_custom_call.1} parent=1 // loop_footer
      %s18 = sadd.s32 1, %s14
    $region7: #{tpu_custom_call.1} parent=1 // loop_footer_branch
      %13 = sbr.rel target = $region3
    $region8: #{tpu_custom_call.1} parent=1 // loop_exit
      _
    %482 = vsyncpa [#allocation3], 1
    %s483 = scalar_lea.sflag [#allocation3], 1
    %484 = vsyncpa %s483, 1
    %485 = vsyncpa [#allocation5], 1
    %s486 = scalar_lea.sflag [#allocation5], 1
    %487 = vsyncpa %s486, 1

</llo_original>
